<compile_context>
chip_gen: v5e
topology: v5e:2x2
jax: 0.10.0
libtpu: 0.0.40
codegen_flags: <defaults>
</compile_context>

<pallas_src>
import functools
import math

import jax
import jax.numpy as jnp
from jax.experimental import pallas as pl
from jax.experimental.pallas import tpu as pltpu


def _round_up(x, m):
    return ((x + m - 1) // m) * m


# -----------------------------------------------------------------------------
# Fused kernel: full-K cosine GEMM + arc-margin epilogue (single output write)
# -----------------------------------------------------------------------------
def _arc_margin_kernel(x_ref, w_ref, invx_ref, invw_ref, lab_ref, col_ref,
                       o_ref, *, s, m, th, mm, easy_margin):
    # bf16 x bf16 -> f32 on the MXU, full K in one shot (no reduction axis).
    acc = jnp.dot(x_ref[...], w_ref[...], preferred_element_type=jnp.float32)
    # L2 normalization folded into the epilogue: two VPU multiplies, free
    # under MXU slack.
    cosine = acc * invx_ref[...] * invw_ref[...]          # (bm,1) and (1,bn) bcast
    phi = cosine - m                                      # this train.py variant
    if easy_margin:
        phi = jnp.where(cosine > 0.0, phi, cosine)
    else:
        phi = jnp.where(cosine > th, phi, cosine - mm)
    one_hot = col_ref[...] == lab_ref[...]                # (1,bn) == (bm,1) -> (bm,bn)
    o_ref[...] = s * jnp.where(one_hot, phi, cosine)


# -----------------------------------------------------------------------------
# Wrapper: norm glue, padding, tiling, pallas_call
# -----------------------------------------------------------------------------
def _pad_to(a, shape, value=0):
    pads = tuple((0, t - s_) for s_, t in zip(a.shape, shape))
    if all(p == (0, 0) for p in pads):
        return a                                          # skip copy when aligned
    return jnp.pad(a, pads, constant_values=value)


def arc_margin_product(x, weight, label, *, s=30.0, m=0.5, easy_margin=False,
                       bm_cap=512, bn_cap=2048):
    """x: (M, K) features, weight: (N, K), label: (M,) int. Returns (M, N) f32."""
    M, K = x.shape
    N, K2 = weight.shape
    assert K == K2
    eps = 1e-12

    # ---- inverse L2 norms (f32, tiny) ---------------------------------------
    x32 = x.astype(jnp.float32)
    w32 = weight.astype(jnp.float32)
    inv_xn = 1.0 / jnp.maximum(
        jnp.sqrt(jnp.sum(x32 * x32, axis=1, keepdims=True)), eps)    # (M, 1)
    inv_wn = (1.0 / jnp.maximum(
        jnp.sqrt(jnp.sum(w32 * w32, axis=1, keepdims=True)), eps)).reshape(1, N)

    # Raw operands straight to bf16; weight cast BEFORE the transpose so the
    # XLA transpose moves half the bytes.
    xb = x.astype(jnp.bfloat16)
    wb = weight.astype(jnp.bfloat16).T                                # (K, N)

    # ---- tile sizes ----------------------------------------------------------
    bm_cap = max(16, (int(bm_cap) // 16) * 16)
    bn_cap = max(128, (int(bn_cap) // 128) * 128)

    Kp = _round_up(K, 128)                 # full K held in one block
    if M <= bm_cap:
        bm = _round_up(M, 16)
    else:
        bm = bm_cap
    Mp = _round_up(M, bm)

    VMEM_BUDGET = 24 * 1024 * 1024         # live pipelined buffers target

    def _tile_bytes(bn_):
        return (2 * bm * Kp * 2            # x tile, double-buffered bf16
                + 2 * Kp * bn_ * 2         # w tile, double-buffered bf16
                + 2 * bm * bn_ * 4)        # out tile, double-buffered f32

    # Shrink bm if the resident-K x tile alone blows the budget.
    while bm > 16 and _tile_bytes(128) > VMEM_BUDGET:
        bm = max(16, (bm // 2) // 16 * 16)
        Mp = _round_up(M, bm)
    # TODO(synk): for extremely large in_features (a (Kp,128) weight tile alone
    # exceeding VMEM) a K-reduction grid axis would be required.

    Nr = _round_up(N, 128)
    if Nr <= bn_cap and _tile_bytes(Nr) <= VMEM_BUDGET:
        bn = Nr                            # whole class dim in one lane-dense block
    else:
        bn = 128
        for c in (2048, 1024, 512, 256):   # divisors of Nr -> no padded-column waste
            if c <= bn_cap and Nr % c == 0 and _tile_bytes(c) <= VMEM_BUDGET:
                bn = c
                break
    Np = _round_up(N, bn)

    # ---- pad (only when needed) ----------------------------------------------
    xp = _pad_to(xb, (Mp, Kp))
    wp = _pad_to(wb, (Kp, Np))
    invx_p = _pad_to(inv_xn, (Mp, 1))                      # padded rows -> 0
    invw_p = _pad_to(inv_wn, (1, Np))                      # padded cols -> 0
    lab_p = _pad_to(label.astype(jnp.int32).reshape(M, 1), (Mp, 1), value=-1)
    col_ids = jnp.arange(Np, dtype=jnp.int32).reshape(1, Np)

    kernel = functools.partial(
        _arc_margin_kernel,
        s=float(s), m=float(m),
        th=math.cos(math.pi - m), mm=math.sin(math.pi - m) * m,
        easy_margin=bool(easy_margin))

    out = pl.pallas_call(
        kernel,
        out_shape=jax.ShapeDtypeStruct((Mp, Np), jnp.float32),
        # N-blocks outer, M-blocks inner: the weight tile's block index depends
        # only on j, so it stays resident in VMEM across the whole M sweep and
        # W is streamed from HBM exactly once.
        grid=(Np // bn, Mp // bm),
        in_specs=[
            pl.BlockSpec((bm, Kp), lambda j, i: (i, 0)),   # x
            pl.BlockSpec((Kp, bn), lambda j, i: (0, j)),   # w (resident over i)
            pl.BlockSpec((bm, 1), lambda j, i: (i, 0)),    # 1/||x||
            pl.BlockSpec((1, bn), lambda j, i: (0, j)),    # 1/||w||
            pl.BlockSpec((bm, 1), lambda j, i: (i, 0)),    # labels
            pl.BlockSpec((1, bn), lambda j, i: (0, j)),    # column ids
        ],
        out_specs=pl.BlockSpec((bm, bn), lambda j, i: (i, j)),
        compiler_params=pltpu.CompilerParams(
            dimension_semantics=("parallel", "parallel"),
            vmem_limit_bytes=48 * 1024 * 1024),
    )(xp, wp, invx_p, invw_p, lab_p, col_ids)
    return out[:M, :N]


# -----------------------------------------------------------------------------
# Pure-JAX references
# -----------------------------------------------------------------------------
def arc_margin_ref(x, weight, label, *, s=30.0, m=0.5, easy_margin=False):
    """Same bf16 operand rounding / folded-norm math as the kernel."""
    eps = 1e-12
    x32 = x.astype(jnp.float32)
    w32 = weight.astype(jnp.float32)
    invx = 1.0 / jnp.maximum(jnp.linalg.norm(x32, axis=1, keepdims=True), eps)
    invw = 1.0 / jnp.maximum(jnp.linalg.norm(w32, axis=1, keepdims=True), eps)
    cosine = jnp.dot(x.astype(jnp.bfloat16), weight.astype(jnp.bfloat16).T,
                     preferred_element_type=jnp.float32) * invx * invw.T
    phi = cosine - m
    th = math.cos(math.pi - m)
    mm = math.sin(math.pi - m) * m
    if easy_margin:
        phi = jnp.where(cosine > 0.0, phi, cosine)
    else:
        phi = jnp.where(cosine > th, phi, cosine - mm)
    one_hot = jax.nn.one_hot(label, weight.shape[0], dtype=cosine.dtype)
    return s * (one_hot * phi + (1.0 - one_hot) * cosine)


def arc_margin_ref_f32(x, weight, label, *, s=30.0, m=0.5, easy_margin=False):
    """Exact PyTorch forward math in f32 (loose-tolerance sanity check)."""
    eps = 1e-12
    x32 = x.astype(jnp.float32)
    w32 = weight.astype(jnp.float32)
    xn = x32 / jnp.maximum(jnp.linalg.norm(x32, axis=1, keepdims=True), eps)
    wn = w32 / jnp.maximum(jnp.linalg.norm(w32, axis=1, keepdims=True), eps)
    cosine = xn @ wn.T
    phi = cosine - m
    th = math.cos(math.pi - m)
    mm = math.sin(math.pi - m) * m
    if easy_margin:
        phi = jnp.where(cosine > 0.0, phi, cosine)
    else:
        phi = jnp.where(cosine > th, phi, cosine - mm)
    one_hot = jax.nn.one_hot(label, weight.shape[0], dtype=cosine.dtype)
    return s * (one_hot * phi + (1.0 - one_hot) * cosine)


if __name__ == "__main__":
    key = jax.random.PRNGKey(0)
    kx, kw, kl = jax.random.split(key, 3)

    # 1) Small shapes consistent with the module: batch=2, in_features=32, classes=64.
    B, IN, OUT = 2, 32, 64
    x = jax.random.normal(kx, (B, IN), jnp.float32)
    limit = math.sqrt(6.0 / (IN + OUT))                   # xavier-uniform-style init
    w = jax.random.uniform(kw, (OUT, IN), jnp.float32, -limit, limit)
    label = jax.random.randint(kl, (B,), 0, OUT)

    fwd = jax.jit(functools.partial(arc_margin_product,
                                    s=30.0, m=0.5, easy_margin=False))
    out = jax.block_until_ready(fwd(x, w, label))
    ref = arc_margin_ref(x, w, label)
    ref32 = arc_margin_ref_f32(x, w, label)
    assert out.shape == (B, OUT), out.shape
    assert bool(jnp.all(jnp.isfinite(out)))
    assert bool(jnp.allclose(out, ref, atol=5e-2, rtol=1e-3)), \
        float(jnp.max(jnp.abs(out - ref)))
    assert bool(jnp.allclose(out, ref32, atol=0.5)), \
        float(jnp.max(jnp.abs(out - ref32)))

    # 2) Single-block full-K path with a bigger class count.
    B2, IN2, OUT2 = 8, 640, 1024
    x2 = jax.random.normal(kx, (B2, IN2), jnp.float32)
    limit2 = math.sqrt(6.0 / (IN2 + OUT2))
    w2 = jax.random.uniform(kw, (OUT2, IN2), jnp.float32, -limit2, limit2)
    label2 = jax.random.randint(kl, (B2,), 0, OUT2)
    out2 = jax.block_until_ready(jax.jit(arc_margin_product)(x2, w2, label2))
    ref2 = arc_margin_ref(x2, w2, label2)
    assert out2.shape == (B2, OUT2)
    assert bool(jnp.allclose(out2, ref2, atol=5e-2, rtol=1e-3)), \
        float(jnp.max(jnp.abs(out2 - ref2)))

    # 3) Forced multi-block grid (3 M-blocks x 3 N-blocks) with K padding, to
    #    exercise the resident-weight M sweep and the per-block one-hot mask.
    B3, IN3, OUT3 = 48, 160, 384
    x3 = jax.random.normal(kx, (B3, IN3), jnp.float32)
    limit3 = math.sqrt(6.0 / (IN3 + OUT3))
    w3 = jax.random.uniform(kw, (OUT3, IN3), jnp.float32, -limit3, limit3)
    label3 = jax.random.randint(kl, (B3,), 0, OUT3)
    out3 = jax.block_until_ready(
        jax.jit(functools.partial(arc_margin_product, bm_cap=16, bn_cap=128))(
            x3, w3, label3))
    ref3 = arc_margin_ref(x3, w3, label3)
    assert out3.shape == (B3, OUT3)
    assert bool(jnp.allclose(out3, ref3, atol=5e-2, rtol=1e-3)), \
        float(jnp.max(jnp.abs(out3 - ref3)))

    print("KERNEL_OK")
</pallas_src>

<mosaic_0001>
module attributes {stable_mosaic.version = 11 : i64} {
  func.func @_arc_margin_kernel(%arg0: i32, %arg1: i32, %arg2: memref<16x128xbf16, #tpu.memory_space<vmem>>, %arg3: memref<128x128xbf16, #tpu.memory_space<vmem>>, %arg4: memref<16x1xf32, #tpu.memory_space<vmem>>, %arg5: memref<1x128xf32, #tpu.memory_space<vmem>>, %arg6: memref<16x1xi32, #tpu.memory_space<vmem>>, %arg7: memref<1x128xi32, #tpu.memory_space<vmem>>, %arg8: memref<16x128xf32, #tpu.memory_space<vmem>>) attributes {dimension_semantics = [#tpu.dimension_semantics<parallel>, #tpu.dimension_semantics<parallel>], iteration_bounds = array<i64: 1, 1>, scalar_prefetch = 0 : i64, scratch_operands = 0 : i64, tpu.core_type = #tpu.core_type<tc>, window_params = [{transform_indices = @transform_0, window_bounds = array<i64: 16, 128>}, {transform_indices = @transform_1, window_bounds = array<i64: 128, 128>}, {transform_indices = @transform_2, window_bounds = array<i64: 16, 1>}, {transform_indices = @transform_3, window_bounds = array<i64: 1, 128>}, {transform_indices = @transform_4, window_bounds = array<i64: 16, 1>}, {transform_indices = @transform_5, window_bounds = array<i64: 1, 128>}, {transform_indices = @transform_6, window_bounds = array<i64: 16, 128>}]} {
    %c0 = arith.constant 0 : index
    %c0_0 = arith.constant 0 : index
    %0 = vector.load %arg2[%c0, %c0_0] : memref<16x128xbf16, #tpu.memory_space<vmem>>, vector<16x128xbf16>
    %c0_1 = arith.constant 0 : index
    %c0_2 = arith.constant 0 : index
    %1 = vector.load %arg3[%c0_1, %c0_2] : memref<128x128xbf16, #tpu.memory_space<vmem>>, vector<128x128xbf16>
    %cst = arith.constant dense<0.000000e+00> : vector<16x128xf32>
    %2 = tpu.matmul %0, %1, %cst {dimension_numbers = #tpu.dot_dimension_numbers<[1], [0], [0], [1], [0, 0, 1, 1], [], []>} : vector<16x128xbf16>, vector<128x128xbf16>, vector<16x128xf32> -> vector<16x128xf32>
    %c0_3 = arith.constant 0 : index
    %c0_4 = arith.constant 0 : index
    %3 = vector.load %arg4[%c0_3, %c0_4] : memref<16x1xf32, #tpu.memory_space<vmem>>, vector<16x1xf32>
    %4 = vector.broadcast %3 : vector<16x1xf32> to vector<16x128xf32>
    %5 = arith.mulf %2, %4 : vector<16x128xf32>
    %c0_5 = arith.constant 0 : index
    %c0_6 = arith.constant 0 : index
    %6 = vector.load %arg5[%c0_5, %c0_6] : memref<1x128xf32, #tpu.memory_space<vmem>>, vector<1x128xf32>
    %7 = vector.broadcast %6 : vector<1x128xf32> to vector<16x128xf32>
    %8 = arith.mulf %5, %7 : vector<16x128xf32>
    %cst_7 = arith.constant 5.000000e-01 : f32
    %9 = vector.broadcast %cst_7 : f32 to vector<16x128xf32>
    %10 = arith.subf %8, %9 : vector<16x128xf32>
    %cst_8 = arith.constant -0.87758255 : f32
    %11 = vector.broadcast %cst_8 : f32 to vector<16x128xf32>
    %12 = arith.cmpf ogt, %8, %11 : vector<16x128xf32>
    %cst_9 = arith.constant 0.239712775 : f32
    %13 = vector.broadcast %cst_9 : f32 to vector<16x128xf32>
    %14 = arith.subf %8, %13 : vector<16x128xf32>
    %15 = arith.select %12, %10, %14 : vector<16x128xi1>, vector<16x128xf32>
    %c0_10 = arith.constant 0 : index
    %c0_11 = arith.constant 0 : index
    %16 = vector.load %arg7[%c0_10, %c0_11] : memref<1x128xi32, #tpu.memory_space<vmem>>, vector<1x128xi32>
    %c0_12 = arith.constant 0 : index
    %c0_13 = arith.constant 0 : index
    %17 = vector.load %arg6[%c0_12, %c0_13] : memref<16x1xi32, #tpu.memory_space<vmem>>, vector<16x1xi32>
    %18 = vector.broadcast %16 : vector<1x128xi32> to vector<16x128xi32>
    %19 = vector.broadcast %17 : vector<16x1xi32> to vector<16x128xi32>
    %20 = arith.cmpi eq, %18, %19 : vector<16x128xi32>
    %21 = arith.select %20, %15, %8 : vector<16x128xi1>, vector<16x128xf32>
    %cst_14 = arith.constant 3.000000e+01 : f32
    %22 = vector.broadcast %cst_14 : f32 to vector<16x128xf32>
    %23 = arith.mulf %22, %21 : vector<16x128xf32>
    %c0_15 = arith.constant 0 : index
    %c0_16 = arith.constant 0 : index
    %24 = vector.load %arg8[%c0_15, %c0_16] : memref<16x128xf32, #tpu.memory_space<vmem>>, vector<16x128xf32>
    tpu.vector_store %arg8[%c0_15, %c0_16], %23 {strides = array<i32>} : memref<16x128xf32, #tpu.memory_space<vmem>>, vector<16x128xf32>,
    return
  }
  func.func @transform_0(%arg0: i32, %arg1: i32) -> (i32, i32) {
    %c0_i32 = arith.constant 0 : i32
    %c0_i32_0 = arith.constant 0 : i32
    return %arg1, %c0_i32 : i32, i32
  }
  func.func @transform_1(%arg0: i32, %arg1: i32) -> (i32, i32) {
    %c0_i32 = arith.constant 0 : i32
    %c0_i32_0 = arith.constant 0 : i32
    return %c0_i32, %arg0 : i32, i32
  }
  func.func @transform_2(%arg0: i32, %arg1: i32) -> (i32, i32) {
    %c0_i32 = arith.constant 0 : i32
    %c0_i32_0 = arith.constant 0 : i32
    return %arg1, %c0_i32 : i32, i32
  }
  func.func @transform_3(%arg0: i32, %arg1: i32) -> (i32, i32) {
    %c0_i32 = arith.constant 0 : i32
    %c0_i32_0 = arith.constant 0 : i32
    return %c0_i32, %arg0 : i32, i32
  }
  func.func @transform_4(%arg0: i32, %arg1: i32) -> (i32, i32) {
    %c0_i32 = arith.constant 0 : i32
    %c0_i32_0 = arith.constant 0 : i32
    return %arg1, %c0_i32 : i32, i32
  }
  func.func @transform_5(%arg0: i32, %arg1: i32) -> (i32, i32) {
    %c0_i32 = arith.constant 0 : i32
    %c0_i32_0 = arith.constant 0 : i32
    return %c0_i32, %arg0 : i32, i32
  }
  func.func @transform_6(%arg0: i32, %arg1: i32) -> (i32, i32) {
    %c0_i32 = arith.constant 0 : i32
    return %arg1, %arg0 : i32, i32
  }
}

</mosaic_0001>

<llo_original>
// kernel: arc_margin_product.1
$region0: #{arc_margin_product.1}
  #allocation0 [shape = 'u32[]', space=smem, size = 0x4, offset = 0x4, fixed_abs, tag = 'smem constant byte address 0x4 - core index']
  #allocation1 [shape = 'u32[72,128]{1,0:T(1,128)}', space=vmem, size = 0x9000, scoped, tag = 'internal scratch']
  %s0 = inlined_call_operand.vmem [shape: bf16[16,128], index: 0, kind: input, shape index: {}]
  %s1 = inlined_call_operand.vmem [shape: bf16[128,128], index: 1, kind: input, shape index: {}]
  %s2 = inlined_call_operand.vmem [shape: f32[16,1], index: 2, kind: input, shape index: {}]
  %s3 = inlined_call_operand.vmem [shape: f32[1,128], index: 3, kind: input, shape index: {}]
  %s4 = inlined_call_operand.vmem [shape: s32[16,1], index: 4, kind: input, shape index: {}]
  %s5 = inlined_call_operand.vmem [shape: s32[1,128], index: 5, kind: input, shape index: {}]
  %s6 = inlined_call_operand.vmem [shape: f32[16,128], index: 6, kind: output, shape index: {}]
  %s7 = sld [smem:[#allocation0]]
  $region34: #{arc_margin_product.1} parent=0
    _
  %s9 = ssub.s32 1, %s7
  %s10 = scalar_select 0, %s9, %s7
  // Predicated region
  $region2: #{arc_margin_product.1} parent=0 // pred_check
    _
  $region3: #{arc_margin_product.1} parent=0 // pred_check_branch
    %12 = sbr.rel (0) target = $region5
  $region4: #{arc_margin_product.1} parent=0 // pred_region
    _
  $region5: #{arc_margin_product.1} parent=0 // pred_fallthru
    _
  // Predicated region
  $region6: #{arc_margin_product.1} parent=0 // pred_check
    _
  $region7: #{arc_margin_product.1} parent=0 // pred_check_branch
    %14 = sbr.rel (0) target = $region9
  $region8: #{arc_margin_product.1} parent=0 // pred_region
    _
  $region9: #{arc_margin_product.1} parent=0 // pred_fallthru
    _
  // Predicated region
  $region10: #{arc_margin_product.1} parent=0 // pred_check
    _
  $region11: #{arc_margin_product.1} parent=0 // pred_check_branch
    %16 = sbr.rel (0) target = $region13
  $region12: #{arc_margin_product.1} parent=0 // pred_region
    _
  $region13: #{arc_margin_product.1} parent=0 // pred_fallthru
    _
  // Predicated region
  $region14: #{arc_margin_product.1} parent=0 // pred_check
    _
  $region15: #{arc_margin_product.1} parent=0 // pred_check_branch
    %18 = sbr.rel (0) target = $region17
  $region16: #{arc_margin_product.1} parent=0 // pred_region
    _
  $region17: #{arc_margin_product.1} parent=0 // pred_fallthru
    _
  // Predicated region
  $region18: #{arc_margin_product.1} parent=0 // pred_check
    _
  $region19: #{arc_margin_product.1} parent=0 // pred_check_branch
    %20 = sbr.rel (0) target = $region21
  $region20: #{arc_margin_product.1} parent=0 // pred_region
    _
  $region21: #{arc_margin_product.1} parent=0 // pred_fallthru
    _
  // Predicated region
  $region22: #{arc_margin_product.1} parent=0 // pred_check
    _
  $region23: #{arc_margin_product.1} parent=0 // pred_check_branch
    %22 = sbr.rel (0) target = $region25
  $region24: #{arc_margin_product.1} parent=0 // pred_region
    _
  $region25: #{arc_margin_product.1} parent=0 // pred_fallthru
    _
  %v23 = vld [vmem:[%s0] sm:$0xf]
  %v24 = vld [vmem:[%s0 + $0x4] sm:$0xf]
  %v25 = vld [vmem:[%s1] sm:$0xf]
  %v26 = vld [vmem:[%s1 + $0x4] sm:$0xf]
  %v27 = vld [vmem:[%s1 + $0x8] sm:$0xf]
  %v28 = vld [vmem:[%s1 + $0xc] sm:$0xf]
  %v29 = vld [vmem:[%s1 + $0x10] sm:$0xf]
  %v30 = vld [vmem:[%s1 + $0x14] sm:$0xf]
  %v31 = vld [vmem:[%s1 + $0x18] sm:$0xf]
  %v32 = vld [vmem:[%s1 + $0x1c] sm:$0xf]
  %v33 = vld [vmem:[%s1 + $0x20] sm:$0xf]
  %v34 = vld [vmem:[%s1 + $0x24] sm:$0xf]
  %v35 = vld [vmem:[%s1 + $0x28] sm:$0xf]
  %v36 = vld [vmem:[%s1 + $0x2c] sm:$0xf]
  %v37 = vld [vmem:[%s1 + $0x30] sm:$0xf]
  %v38 = vld [vmem:[%s1 + $0x34] sm:$0xf]
  %v39 = vld [vmem:[%s1 + $0x38] sm:$0xf]
  %v40 = vld [vmem:[%s1 + $0x3c] sm:$0xf]
  %v43 = vunpack.c.l.b16 %v23
  %v44 = vunpack.c.l.b16 %v24
  %v45 = vpack.c.b16 %v44, %v43
  %v63 = vunpack.c.l.b16 %v25
  %v64 = vunpack.c.l.b16 %v26
  %v65 = vunpack.c.l.b16 %v27
  %v66 = vunpack.c.l.b16 %v28
  %v67 = vunpack.c.l.b16 %v29
  %v68 = vunpack.c.l.b16 %v30
  %v69 = vunpack.c.l.b16 %v31
  %v70 = vunpack.c.l.b16 %v32
  %v71 = vunpack.c.l.b16 %v33
  %v72 = vunpack.c.l.b16 %v34
  %v73 = vunpack.c.l.b16 %v35
  %v74 = vunpack.c.l.b16 %v36
  %v75 = vunpack.c.l.b16 %v37
  %v76 = vunpack.c.l.b16 %v38
  %v77 = vunpack.c.l.b16 %v39
  %v78 = vunpack.c.l.b16 %v40
  %v79 = vpack.c.b16 %v64, %v63
  %v80 = vpack.c.b16 %v66, %v65
  %v81 = vpack.c.b16 %v68, %v67
  %v82 = vpack.c.b16 %v70, %v69
  %v83 = vpack.c.b16 %v72, %v71
  %v84 = vpack.c.b16 %v74, %v73
  %v85 = vpack.c.b16 %v76, %v75
  %v86 = vpack.c.b16 %v78, %v77
  %95 = vmatpush.bf16.msra.mxu0 %v86
  %96 = vmatpush.bf16.msra.mxu0 %v85
  %97 = vmatpush.bf16.msra.mxu0 %v84
  %98 = vmatpush.bf16.msra.mxu0 %v83
  %99 = vmatpush.bf16.msra.mxu0 %v82
  %100 = vmatpush.bf16.msra.mxu0 %v81
  %101 = vmatpush.bf16.msra.mxu0 %v80
  %102 = vmatpush.bf16.msra.mxu0 %v79
  %103 = vmatmul.bf16.gmra.mxu0 %v45
  %v104 = vpop.f32.mrf.mxu0
  %v105 = vadd.f32 0.0, %v104
  %v106 = vpop.f32.mrf.mxu0
  %v107 = vadd.f32 0.0, %v106
  %108 = vdwg.mxu0
  %v109 = vld [vmem:[%s2] sm:$0xff]
  %v110 = vld [vmem:[%s2 + $0x8] sm:$0xff]
  %112 = vset.pattern.permute.xlu0 0
  %113 = vperm.xlu0 %112, %v109
  %v114 = vpop.permute.xlu0 %113
  %117 = vset.pattern.permute.xlu0 0
  %118 = vperm.xlu0 %117, %v110
  %v119 = vpop.permute.xlu0 %118
  %v121 = vmul.f32 %v105, %v114
  %v122 = vmul.f32 %v107, %v119
  %v123 = vld [vmem:[%s3] sm:$0x1]
  %v125 = vperm.slane %v123, 0
  %v127 = vmul.f32 %v121, %v125
  %v128 = vmul.f32 %v122, %v125
  %v129 = vsub.f32 %v127, 0.5
  %v130 = vsub.f32 %v128, 0.5
  %vm131 = vcmp.gt.f32.partialorder %v127, -0.87758255
  %vm132 = vcmp.gt.f32.partialorder %v128, -0.87758255
  %v133 = vsub.f32 %v127, 0.23971277
  %v134 = vsub.f32 %v128, 0.23971277
  %v135 = vsel %vm131, %v129, %v133
  %v136 = vsel %vm132, %v130, %v134
  %v137 = vld [vmem:[%s5] sm:$0x1]
  %v138 = vld [vmem:[%s4] sm:$0xff]
  %v139 = vld [vmem:[%s4 + $0x8] sm:$0xff]
  %v140 = vperm.slane %v137, 0
  %141 = vset.pattern.permute.xlu0 0
  %142 = vperm.xlu0 %141, %v138
  %v143 = vpop.permute.xlu0 %142
  %144 = vset.pattern.permute.xlu0 0
  %145 = vperm.xlu0 %144, %v139
  %v146 = vpop.permute.xlu0 %145
  %vm147 = vcmp.eq.s32.totalorder %v140, %v143
  %vm148 = vcmp.eq.s32.totalorder %v140, %v146
  %v149 = vsel %vm147, %v135, %v127
  %v150 = vsel %vm148, %v136, %v128
  %v151 = vmul.f32 %v149, 30.0
  %v152 = vmul.f32 %v150, 30.0
  %153 = vst [vmem:[%s6] sm:$0xff] %v151
  %154 = vst [vmem:[%s6 + $0x8] sm:$0xff] %v152
  // Predicated region
  $region26: #{arc_margin_product.1} parent=0 // pred_check
    _
  $region27: #{arc_margin_product.1} parent=0 // pred_check_branch
    %156 = sbr.rel (0) target = $region29
  $region28: #{arc_margin_product.1} parent=0 // pred_region
    _
  $region29: #{arc_margin_product.1} parent=0 // pred_fallthru
    _
  // Predicated region
  $region30: #{arc_margin_product.1} parent=0 // pred_check
    _
  $region31: #{arc_margin_product.1} parent=0 // pred_check_branch
    %158 = sbr.rel (0) target = $region33
  $region32: #{arc_margin_product.1} parent=0 // pred_region
    _
  $region33: #{arc_margin_product.1} parent=0 // pred_fallthru
    _

</llo_original>
